<compile_context>
chip_gen: v5e
topology: v5e:2x2
jax: 0.10.0
libtpu: 0.0.40
codegen_flags: <defaults>
</compile_context>

<pallas_src>
import jax
import jax.numpy as jnp
from jax.experimental import pallas as pl
from jax.experimental.pallas import tpu as pltpu


def _round_up(x, m):
    return (x + m - 1) // m * m


def _jsd_kernel(e1_ref, e2_ref, out_ref):
    # e1_ref / e2_ref: (B, TE) tile (full batch, TE embedding columns).
    e1 = e1_ref[...].astype(jnp.float32)
    e2 = e2_ref[...].astype(jnp.float32)

    # Column-wise (dim=0 of the virtual [e1; e2] concat) stable softmax.
    mx = jnp.maximum(jnp.max(e1, axis=0, keepdims=True),
                     jnp.max(e2, axis=0, keepdims=True))            # (1, TE)
    x1 = jnp.exp(e1 - mx)
    x2 = jnp.exp(e2 - mx)
    denom = jnp.sum(x1, axis=0, keepdims=True) + jnp.sum(x2, axis=0, keepdims=True)
    inv = 1.0 / denom                                               # exact (tolerance-critical)

    # m = 0.5 * (p1 + p2); fused loss contribution m*(log(m) - m).
    m = (0.5 * inv) * (x1 + x2)                                     # (B, TE)
    contrib = m * (jnp.log(m) - m)

    # Per-column partial sums: only a cheap sublane reduce per tile; the final
    # cross-lane reduce and the /B normalization happen once in the wrapper.
    out_ref[...] = jnp.sum(contrib, axis=0, keepdims=True)          # (1, TE)


def _choose_block_e(b, e, max_block_e, vmem_tile_budget_bytes=40 << 20):
    """Pick a lane-tile width TE (multiple of 128) whose 2-input x 2-buffer
    f32 working set stays under the budget (sized for v7x's 64 MiB VMEM)."""
    te = _round_up(min(max_block_e, _round_up(e, 128)), 128)
    while te > 128 and 2 * 2 * b * te * 4 > vmem_tile_budget_bytes:
        te = max(128, (te // 2) // 128 * 128)
    return te


def jsd_loss(e1, e2, *, block_e=1024):
    """e1, e2: (B, E) arrays (f32 or bf16). Returns scalar f32 JSD loss."""
    assert e1.shape == e2.shape and e1.ndim == 2
    b, e = e1.shape

    te = _choose_block_e(b, e, block_e)
    e_pad = _round_up(e, te)
    if e_pad != e:
        # Pad embedding axis up to a multiple of the lane tile; padded columns
        # are finite and get sliced off before the final sum.
        pad = ((0, 0), (0, e_pad - e))
        e1 = jnp.pad(e1, pad)
        e2 = jnp.pad(e2, pad)
    n_tiles = e_pad // te

    # 2 inputs x 2 pipeline buffers of (B, TE) f32 tiles, plus a little margin.
    vmem_limit = int(min(max(2 * 2 * b * te * 4 + (4 << 20), 16 << 20), 64 << 20))

    partials = pl.pallas_call(
        _jsd_kernel,
        grid=(n_tiles,),
        in_specs=[
            pl.BlockSpec((b, te), lambda j: (0, j)),
            pl.BlockSpec((b, te), lambda j: (0, j)),
        ],
        out_specs=pl.BlockSpec((1, te), lambda j: (0, j)),
        out_shape=jax.ShapeDtypeStruct((1, e_pad), jnp.float32),
        compiler_params=pltpu.CompilerParams(
            dimension_semantics=("parallel",),
            vmem_limit_bytes=vmem_limit,
        ),
    )(e1, e2)

    # Tiny finalize (done by XLA): drop padded columns, sum, normalize by B.
    return jnp.sum(partials[0, :e]) / jnp.float32(b)


def _jsd_loss_ref(e1, e2):
    """Pure-JAX reference matching the PyTorch module exactly."""
    e = jnp.concatenate([e1, e2], axis=0)
    logits = jax.nn.log_softmax(e, axis=0)
    p = jnp.exp(logits)
    b = e1.shape[0]
    p1, p2 = p[:b], p[b:]
    m = 0.5 * (p1 + p2)
    kl = lambda inp, tgt: jnp.sum(tgt * (jnp.log(tgt) - inp)) / b
    return 0.5 * (kl(p1, m) + kl(p2, m))


if __name__ == "__main__":
    key = jax.random.PRNGKey(0)
    k1, k2, k3, k4 = jax.random.split(key, 4)

    # Small shapes consistent with the module: (batch_size, embedding_size).
    B, E = 2, 32
    e1 = jax.random.normal(k1, (B, E), dtype=jnp.float32)
    e2 = jax.random.normal(k2, (B, E), dtype=jnp.float32)
    loss = jax.block_until_ready(jsd_loss(e1, e2))
    ref = jax.block_until_ready(_jsd_loss_ref(e1, e2))
    assert jnp.allclose(loss, ref, rtol=1e-4, atol=1e-6), (loss, ref)

    # A second shape that exercises the multi-step tiled grid path.
    B2, E2 = 4, 384
    f1 = jax.random.normal(k3, (B2, E2), dtype=jnp.float32)
    f2 = jax.random.normal(k4, (B2, E2), dtype=jnp.float32)
    loss2 = jax.block_until_ready(jsd_loss(f1, f2, block_e=128))
    ref2 = jax.block_until_ready(_jsd_loss_ref(f1, f2))
    assert jnp.allclose(loss2, ref2, rtol=1e-4, atol=1e-6), (loss2, ref2)

    print("KERNEL_OK")
</pallas_src>

<mosaic_0001>
module attributes {stable_mosaic.version = 11 : i64} {
  func.func @_jsd_kernel(%arg0: i32, %arg1: memref<2x128xf32, #tpu.memory_space<vmem>>, %arg2: memref<2x128xf32, #tpu.memory_space<vmem>>, %arg3: memref<1x128xf32, #tpu.memory_space<vmem>>) attributes {dimension_semantics = [#tpu.dimension_semantics<parallel>], iteration_bounds = array<i64: 1>, scalar_prefetch = 0 : i64, scratch_operands = 0 : i64, tpu.core_type = #tpu.core_type<tc>, window_params = [{transform_indices = @transform_0, window_bounds = array<i64: 2, 128>}, {transform_indices = @transform_1, window_bounds = array<i64: 2, 128>}, {transform_indices = @transform_2, window_bounds = array<i64: 1, 128>}]} {
    %c0 = arith.constant 0 : index
    %c0_0 = arith.constant 0 : index
    %0 = vector.load %arg1[%c0, %c0_0] : memref<2x128xf32, #tpu.memory_space<vmem>>, vector<2x128xf32>
    %c0_1 = arith.constant 0 : index
    %c0_2 = arith.constant 0 : index
    %1 = vector.load %arg2[%c0_1, %c0_2] : memref<2x128xf32, #tpu.memory_space<vmem>>, vector<2x128xf32>
    %cst = arith.constant dense<0xFF800000> : vector<128xf32>
    %2 = vector.multi_reduction <maximumf>, %0, %cst [0] : vector<2x128xf32> to vector<128xf32>
    %3 = vector.shape_cast %2 : vector<128xf32> to vector<1x128xf32>
    %cst_3 = arith.constant dense<0xFF800000> : vector<128xf32>
    %4 = vector.multi_reduction <maximumf>, %1, %cst_3 [0] : vector<2x128xf32> to vector<128xf32>
    %5 = vector.shape_cast %4 : vector<128xf32> to vector<1x128xf32>
    %6 = arith.maximumf %3, %5 : vector<1x128xf32>
    %7 = vector.broadcast %6 : vector<1x128xf32> to vector<2x128xf32>
    %8 = arith.subf %0, %7 : vector<2x128xf32>
    %9 = math.exp %8 : vector<2x128xf32>
    %10 = vector.broadcast %6 : vector<1x128xf32> to vector<2x128xf32>
    %11 = arith.subf %1, %10 : vector<2x128xf32>
    %12 = math.exp %11 : vector<2x128xf32>
    %cst_4 = arith.constant dense<0.000000e+00> : vector<128xf32>
    %13 = vector.multi_reduction <add>, %9, %cst_4 [0] : vector<2x128xf32> to vector<128xf32>
    %14 = vector.shape_cast %13 : vector<128xf32> to vector<1x128xf32>
    %cst_5 = arith.constant dense<0.000000e+00> : vector<128xf32>
    %15 = vector.multi_reduction <add>, %12, %cst_5 [0] : vector<2x128xf32> to vector<128xf32>
    %16 = vector.shape_cast %15 : vector<128xf32> to vector<1x128xf32>
    %17 = arith.addf %14, %16 : vector<1x128xf32>
    %cst_6 = arith.constant 1.000000e+00 : f32
    %18 = vector.broadcast %cst_6 : f32 to vector<1x128xf32>
    %19 = arith.divf %18, %17 : vector<1x128xf32>
    %cst_7 = arith.constant 5.000000e-01 : f32
    %20 = vector.broadcast %cst_7 : f32 to vector<1x128xf32>
    %21 = arith.mulf %20, %19 : vector<1x128xf32>
    %22 = arith.addf %9, %12 : vector<2x128xf32>
    %23 = vector.broadcast %21 : vector<1x128xf32> to vector<2x128xf32>
    %24 = arith.mulf %23, %22 : vector<2x128xf32>
    %25 = math.log %24 : vector<2x128xf32>
    %26 = arith.subf %25, %24 : vector<2x128xf32>
    %27 = arith.mulf %24, %26 : vector<2x128xf32>
    %cst_8 = arith.constant dense<0.000000e+00> : vector<128xf32>
    %28 = vector.multi_reduction <add>, %27, %cst_8 [0] : vector<2x128xf32> to vector<128xf32>
    %29 = vector.shape_cast %28 : vector<128xf32> to vector<1x128xf32>
    %c0_9 = arith.constant 0 : index
    %c0_10 = arith.constant 0 : index
    %30 = vector.load %arg3[%c0_9, %c0_10] : memref<1x128xf32, #tpu.memory_space<vmem>>, vector<1x128xf32>
    tpu.vector_store %arg3[%c0_9, %c0_10], %29 {strides = array<i32>} : memref<1x128xf32, #tpu.memory_space<vmem>>, vector<1x128xf32>,
    return
  }
  func.func @transform_0(%arg0: i32) -> (i32, i32) {
    %c0_i32 = arith.constant 0 : i32
    %c0_i32_0 = arith.constant 0 : i32
    return %c0_i32, %arg0 : i32, i32
  }
  func.func @transform_1(%arg0: i32) -> (i32, i32) {
    %c0_i32 = arith.constant 0 : i32
    %c0_i32_0 = arith.constant 0 : i32
    return %c0_i32, %arg0 : i32, i32
  }
  func.func @transform_2(%arg0: i32) -> (i32, i32) {
    %c0_i32 = arith.constant 0 : i32
    %c0_i32_0 = arith.constant 0 : i32
    return %c0_i32, %arg0 : i32, i32
  }
}

</mosaic_0001>

<llo_original>
// kernel: tpu_custom_call.1
$region0: #{tpu_custom_call.1}
  #allocation0 [shape = 'u32[]', space=smem, size = 0x4, offset = 0x4, fixed_abs, tag = 'smem constant byte address 0x4 - core index']
  #allocation1 [shape = 'u32[72,128]{1,0:T(1,128)}', space=vmem, size = 0x9000, scoped, tag = 'internal scratch']
  %s0 = inlined_call_operand.hbm [shape: f32[2,128], index: 0, kind: input, shape index: {}]
  %s1 = inlined_call_operand.hbm [shape: f32[2,128], index: 1, kind: input, shape index: {}]
  %s2 = inlined_call_operand.hbm [shape: f32[1,128], index: 2, kind: output, shape index: {}]
  %s3 = sld [smem:[#allocation0]]
  $region26: #{tpu_custom_call.1} parent=0
    _
  %s5 = ssub.s32 1, %s3
  %s6 = scalar_select 0, %s5, %s3
  $region1: #{tpu_custom_call.1} parent=0
    #allocation2 [shape = 'u8[1024]{0}', space=vmem, size = 0x400, scoped, tag = 'input window, operand 0, single buffered']
    #allocation3 [shape = 's32[1]{0}', space=sflag, size = 0x4, scoped, tag = 'scoped memory for tpu_custom_call.1']
    #allocation4 [shape = 's32[1]{0}', space=sflag, size = 0x4, scoped, tag = 'scoped memory for tpu_custom_call.1']
    #allocation5 [shape = 'u8[1024]{0}', space=vmem, size = 0x400, scoped, tag = 'input window, operand 1, single buffered']
    #allocation6 [shape = 's32[1]{0}', space=sflag, size = 0x4, scoped, tag = 'scoped memory for tpu_custom_call.1']
    #allocation7 [shape = 'u8[512]{0}', space=vmem, size = 0x400, scoped, tag = 'output window, operand 0, single buffered']
    %7 = vsyncpa [#allocation3], 0
    %8 = vsyncpa [#allocation6], 0
    %9 = vsyncpa [#allocation4], 0
    // Predicated region
    $region2: #{tpu_custom_call.1} parent=1 // pred_check
      _
    $region3: #{tpu_custom_call.1} parent=1 // pred_check_branch
      %11 = sbr.rel (0) target = $region5
    $region4: #{tpu_custom_call.1} parent=1 // pred_region
      %13 = vsyncadd [#allocation3], 0
      %s15 = sshll.u32 %s0, 4
      %s16 = int_to_ptr.hbm [resolvable:$true] %s15
      %s17 = sshll.u32 [#allocation2], 4
      %s18 = int_to_ptr.vmem [resolvable:$true] %s17
      %20 = dma.hbm_to_vmem [thread:$0]  %s16, 32, %s18, [#allocation3]
    $region5: #{tpu_custom_call.1} parent=1 // pred_fallthru
      _
    // Predicated region
    $region6: #{tpu_custom_call.1} parent=1 // pred_check
      _
    $region7: #{tpu_custom_call.1} parent=1 // pred_check_branch
      %22 = sbr.rel (0) target = $region9
    $region8: #{tpu_custom_call.1} parent=1 // pred_region
      %24 = vsyncadd [#allocation6], 0
      %s26 = sshll.u32 %s1, 4
      %s27 = int_to_ptr.hbm [resolvable:$true] %s26
      %s28 = sshll.u32 [#allocation5], 4
      %s29 = int_to_ptr.vmem [resolvable:$true] %s28
      %31 = dma.hbm_to_vmem [thread:$0]  %s27, 32, %s29, [#allocation6]
    $region9: #{tpu_custom_call.1} parent=1 // pred_fallthru
      _
    // Predicated region
    $region10: #{tpu_custom_call.1} parent=1 // pred_check
      _
    $region11: #{tpu_custom_call.1} parent=1 // pred_check_branch
      %33 = sbr.rel (0) target = $region13
    $region12: #{tpu_custom_call.1} parent=1 // pred_region
      %35 = dma.done [#allocation3], 32
    $region13: #{tpu_custom_call.1} parent=1 // pred_fallthru
      _
    // Predicated region
    $region14: #{tpu_custom_call.1} parent=1 // pred_check
      _
    $region15: #{tpu_custom_call.1} parent=1 // pred_check_branch
      %37 = sbr.rel (0) target = $region17
    $region16: #{tpu_custom_call.1} parent=1 // pred_region
      %39 = dma.done [#allocation6], 32
    $region17: #{tpu_custom_call.1} parent=1 // pred_fallthru
      _
    %v40 = vld [vmem:[#allocation2] sm:$0x3]
    %v41 = vld [vmem:[#allocation5] sm:$0x3]
    %vm42 = vcmask 1041408
    %v43 = vsel %vm42, %v40, -inf
    %v44 = vrot.slane %v43, 4
    %v45 = vmax.f32 %v43, %v44
    %v46 = vrot.slane %v45, 2
    %v47 = vmax.f32 %v45, %v46
    %v48 = vrot.slane %v47, 1
    %v49 = vmax.f32 %v47, %v48
    %v50 = vsel %vm42, %v41, -inf
    %v51 = vrot.slane %v50, 4
    %v52 = vmax.f32 %v50, %v51
    %v53 = vrot.slane %v52, 2
    %v54 = vmax.f32 %v52, %v53
    %v55 = vrot.slane %v54, 1
    %v56 = vmax.f32 %v54, %v55
    %v57 = vmax.f32 %v49, %v56
    %v58 = vsub.f32 %v40, %v57
    %v59 = vmul.f32 %v58, 1.442695
    %v60 = vpow.pop %v59
    %v61 = vsub.f32 %v41, %v57
    %v62 = vmul.f32 %v61, 1.442695
    %v63 = vpow.pop %v62
    %v64 = vsel %vm42, %v60, 0.0
    %v65 = vrot.slane %v64, 4
    %v66 = vadd.f32 %v64, %v65
    %v67 = vrot.slane %v66, 2
    %v68 = vadd.f32 %v66, %v67
    %v69 = vrot.slane %v68, 1
    %v70 = vadd.f32 %v68, %v69
    %v71 = vsel %vm42, %v63, 0.0
    %v72 = vrot.slane %v71, 4
    %v73 = vadd.f32 %v71, %v72
    %v74 = vrot.slane %v73, 2
    %v75 = vadd.f32 %v73, %v74
    %v76 = vrot.slane %v75, 1
    %v77 = vadd.f32 %v75, %v76
    %v78 = vadd.f32 %v70, %v77
    %v79 = vrcp.pop %v78
    %v80 = vmul.f32 %v78, %v79
    %v81 = vsub.f32 1.0, %v80
    %v82 = vmul.f32 %v79, %v81
    %v83 = vadd.f32 %v79, %v82
    %vm84 = vweird.f32 %v78
    %vm85 = vweird.f32 %v79
    %vm86 = vmor %vm84, %vm85
    %v87 = vsel %vm86, %v79, %v83
    %v88 = vand.u32 2147483647, %v78
    %vm89 = vcmp.eq.f32.partialorder %v88, 8.507059e+37
    %v90 = vand.u32 %v78, 2147483648
    %v91 = vor.u32 1.1754944e-38, %v90
    %v92 = vsel %vm89, %v91, %v87
    %v93 = vmul.f32 1.0, %v92
    %v94 = vmul.f32 %v93, 0.5
    %v95 = vadd.f32 %v60, %v63
    %v96 = vmul.f32 %v94, %v95
    %v97 = vlog2.pop %v96
    %v98 = vmul.f32 %v97, 0.6931472
    %v99 = vsub.f32 %v98, %v96
    %v100 = vmul.f32 %v96, %v99
    %v101 = vsel %vm42, %v100, 0.0
    %v102 = vrot.slane %v101, 4
    %v103 = vadd.f32 %v101, %v102
    %v104 = vrot.slane %v103, 2
    %v105 = vadd.f32 %v103, %v104
    %v106 = vrot.slane %v105, 1
    %v107 = vadd.f32 %v105, %v106
    %108 = vst [vmem:[#allocation7] sm:$0x1] %v107
    // Predicated region
    $region18: #{tpu_custom_call.1} parent=1 // pred_check
      _
    $region19: #{tpu_custom_call.1} parent=1 // pred_check_branch
      %110 = sbr.rel (0) target = $region21
    $region20: #{tpu_custom_call.1} parent=1 // pred_region
      %112 = vsyncadd [#allocation4], 0
      %s114 = sshll.u32 [#allocation7], 4
      %s115 = int_to_ptr.vmem [resolvable:$true] %s114
      %s116 = sshll.u32 %s2, 4
      %s117 = int_to_ptr.hbm [resolvable:$true] %s116
      %119 = dma.vmem_to_hbm [thread:$0]  %s115, 16, %s117, [#allocation4]
    $region21: #{tpu_custom_call.1} parent=1 // pred_fallthru
      _
    // Predicated region
    $region22: #{tpu_custom_call.1} parent=1 // pred_check
      _
    $region23: #{tpu_custom_call.1} parent=1 // pred_check_branch
      %121 = sbr.rel (0) target = $region25
    $region24: #{tpu_custom_call.1} parent=1 // pred_region
      %123 = dma.done [#allocation4], 16
    $region25: #{tpu_custom_call.1} parent=1 // pred_fallthru
      _
    %124 = vsyncpa [#allocation3], 1
    %125 = vsyncpa [#allocation6], 1
    %126 = vsyncpa [#allocation4], 1

</llo_original>
